<compile_context>
chip_gen: v5e
topology: v5e:2x2
jax: 0.10.0
libtpu: 0.0.40
codegen_flags: <defaults>
</compile_context>

<pallas_src>
import functools

import jax
import jax.numpy as jnp
from jax.experimental import pallas as pl
from jax.experimental.pallas import tpu as pltpu


def _round_up(x, m):
    return (x + m - 1) // m * m


def _cdiv(a, b):
    return (a + b - 1) // b


def _choose_tiles(B, L_out, KC_pad, EW_pad, itemsize,
                  max_b_tile=256, vmem_budget=10 * 1024 * 1024):
    """Pick (n_tiles, b_tile): even tile count when >1 (v7x megacore split) and a
    per-step VMEM footprint under `vmem_budget` (safe on every TPU generation)."""
    n_tiles = max(1, _cdiv(_round_up(B, 8), max_b_tile))
    while True:
        if n_tiles > 1 and n_tiles % 2:
            n_tiles += 1                                  # even split over 2 TensorCores
        b_tile = _round_up(_cdiv(B, n_tiles), 8)
        est = (2 * L_out * b_tile * KC_pad * itemsize     # x slab (double buffered)
               + 2 * KC_pad * EW_pad * itemsize           # resident weight
               + 2 * b_tile * EW_pad * 4                  # f32 output (double buffered)
               + b_tile * EW_pad * 4)                     # f32 running max value
        if est <= vmem_budget or b_tile <= 8:
            return n_tiles, b_tile
        n_tiles *= 2


def _cnn_kernel(x_ref, w_ref, b_ref, o_ref, *, l_out, precision):
    """One grid step = one tile of words, ALL conv positions.

    x_ref : (L_out, b_tile, KC_pad)  im2col slab (compute dtype), VMEM resident
    w_ref : (KC_pad, EW_pad)         flattened conv weight (compute dtype), resident
    b_ref : (1, EW_pad)              bias (f32)
    o_ref : (b_tile, EW_pad)         output block (f32)
    """
    w = w_ref[...]
    # Unrolled loop over conv positions on the resident slab: one lane/sublane-
    # dense MXU matmul per position, VPU running max. No grid reduction axis,
    # no scratch accumulator, single lane-dense store at the end.
    acc = jnp.dot(x_ref[0], w, preferred_element_type=jnp.float32,
                  precision=precision)
    for l in range(1, l_out):
        y = jnp.dot(x_ref[l], w, preferred_element_type=jnp.float32,
                    precision=precision)
        acc = jnp.maximum(acc, y)
    # bias + relu hoisted past the max (bias const per channel, relu monotone).
    o_ref[...] = jnp.maximum(acc + b_ref[...], 0.0)


def cnn_forward(x, weight, bias, kernel_size, padding=1, *,
                compute_dtype=jnp.bfloat16, max_b_tile=256):
    """x: (B, e_char, m_word) [NCW, as PyTorch Conv1d expects].
    weight: (e_word, e_char, kernel_size), bias: (e_word,).
    Returns (B, e_word) float32 = max_l relu(conv1d(x) + bias)."""
    B, e_char, m_word = x.shape
    e_word, e_char_w, K = weight.shape
    assert K == kernel_size and e_char_w == e_char
    L_out = m_word + 2 * padding - K + 1
    assert L_out >= 1, "kernel_size / padding combination gives empty conv output"

    KC = K * e_char
    # Tiny contraction: 128-lane padding would be mostly zeros -> let XLA do it.
    if KC < 64:
        return _cnn_xla(x, weight, bias, kernel_size, padding)

    KC_pad = _round_up(KC, 128)                # lane-dense contraction dim
    EW_pad = _round_up(e_word, 128)            # lane-dense output dim
    itemsize = jnp.dtype(compute_dtype).itemsize
    n_tiles, b_tile = _choose_tiles(B, L_out, KC_pad, EW_pad, itemsize,
                                    max_b_tile=max_b_tile)
    B_pad = n_tiles * b_tile

    # ---- layout glue (wrapper side, compute dtype end-to-end, no compute) ----
    xc = x.astype(compute_dtype)
    x_p = jnp.pad(xc, ((0, B_pad - B), (0, 0), (padding, padding)))    # (B_pad, e_char, m+2p)
    x_pm = jnp.transpose(x_p, (2, 0, 1))                               # (m+2p, B_pad, e_char)
    parts = [x_pm[j:j + L_out] for j in range(K)]                      # K shifted views
    if KC_pad > KC:
        parts.append(jnp.zeros((L_out, B_pad, KC_pad - KC), compute_dtype))
    # single fused materialization: (L_out, B_pad, KC_pad), channel idx = j*e_char + c
    x_win = jnp.concatenate(parts, axis=-1)
    # TODO(synk): the remaining K-fold im2col expansion could be fused into the
    # kernel (K tap matmuls on the raw per-tile activation block) to cut
    # activation HBM traffic ~Kx once the kernel is DMA-bound.

    w2 = jnp.transpose(weight, (2, 1, 0)).reshape(KC, e_word)          # [j*e_char+c, o]
    w2 = jnp.pad(w2, ((0, KC_pad - KC), (0, EW_pad - e_word))).astype(compute_dtype)
    b2 = jnp.pad(bias.astype(jnp.float32), (0, EW_pad - e_word)).reshape(1, EW_pad)

    # bf16 operands + f32 accumulation is the fast path on v5e/v6e/v7x; the
    # optional f32-operand path maps to a multi-pass (HIGHEST) MXU matmul.
    precision = (jax.lax.Precision.HIGHEST if compute_dtype == jnp.float32 else None)
    kernel = functools.partial(_cnn_kernel, l_out=L_out, precision=precision)

    out = pl.pallas_call(
        kernel,
        out_shape=jax.ShapeDtypeStruct((B_pad, EW_pad), jnp.float32),
        grid_spec=pltpu.PrefetchScalarGridSpec(
            num_scalar_prefetch=0,
            grid=(n_tiles,),                              # word tiles only; L is in-kernel
            in_specs=[
                # whole-L im2col slab for this word tile
                pl.BlockSpec((L_out, b_tile, KC_pad), lambda i: (0, i, 0)),
                # weight / bias stay resident (constant block index)
                pl.BlockSpec((KC_pad, EW_pad), lambda i: (0, 0)),
                pl.BlockSpec((1, EW_pad), lambda i: (0, 0)),
            ],
            out_specs=pl.BlockSpec((b_tile, EW_pad), lambda i: (i, 0)),
        ),
        compiler_params=pltpu.CompilerParams(
            dimension_semantics=("parallel",)),
    )(x_win, w2, b2)

    return out[:B, :e_word]


def cnn_reference(x, weight, bias, kernel_size, padding=1):
    """Pure-JAX reference matching PyTorch Conv1d + relu + max semantics."""
    e_word = weight.shape[0]
    L_out = x.shape[-1] + 2 * padding - kernel_size + 1
    x_pad = jnp.pad(x.astype(jnp.float32), ((0, 0), (0, 0), (padding, padding)))
    conv = jnp.zeros((x.shape[0], e_word, L_out), jnp.float32)
    for j in range(kernel_size):
        conv = conv + jnp.einsum('oc,bcl->bol',
                                 weight[:, :, j].astype(jnp.float32),
                                 x_pad[:, :, j:j + L_out],
                                 precision=jax.lax.Precision.HIGHEST)
    conv = conv + bias.astype(jnp.float32)[None, :, None]
    return jnp.max(jnp.maximum(conv, 0.0), axis=-1)


def _cnn_xla(x, weight, bias, kernel_size, padding=1):
    # Fallback for tiny contractions where the MXU/im2col pad is mostly zeros.
    return cnn_reference(x, weight, bias, kernel_size, padding)


if __name__ == "__main__":
    key = jax.random.PRNGKey(0)

    # --- small shapes consistent with the module (char-CNN over a few words) ---
    B, e_char, m_word = 8, 50, 16
    e_word, kernel_size = 128, 5
    kx, kw, kb = jax.random.split(key, 3)
    x = jax.random.normal(kx, (B, e_char, m_word), dtype=jnp.float32)
    weight = jax.random.normal(kw, (e_word, e_char, kernel_size), dtype=jnp.float32) * 0.1
    bias = jax.random.normal(kb, (e_word,), dtype=jnp.float32) * 0.1

    out = jax.block_until_ready(cnn_forward(x, weight, bias, kernel_size))
    ref = cnn_reference(x, weight, bias, kernel_size)
    assert out.shape == (B, e_word), out.shape
    assert jnp.allclose(out, ref, atol=1e-1, rtol=1e-1), "bf16 mismatch vs reference"

    # Optional f32-operand path (multi-pass MXU, higher accuracy).
    out_f32 = jax.block_until_ready(
        cnn_forward(x, weight, bias, kernel_size, compute_dtype=jnp.float32))
    assert jnp.allclose(out_f32, ref, atol=2e-2, rtol=2e-2), "f32 mismatch vs reference"

    # --- larger multi-tile run: B=300 -> 2 tiles of 152 (even megacore split) ---
    B2, e_char2, m_word2 = 300, 50, 21
    e_word2, K2 = 256, 5
    k1, k2, k3 = jax.random.split(jax.random.PRNGKey(1), 3)
    x2 = jax.random.normal(k1, (B2, e_char2, m_word2), dtype=jnp.float32)
    w_big = jax.random.normal(k2, (e_word2, e_char2, K2), dtype=jnp.float32) * 0.05
    b_big = jax.random.normal(k3, (e_word2,), dtype=jnp.float32) * 0.05
    out2 = jax.block_until_ready(cnn_forward(x2, w_big, b_big, K2))
    ref2 = cnn_reference(x2, w_big, b_big, K2)
    assert out2.shape == (B2, e_word2), out2.shape
    assert jnp.allclose(out2, ref2, atol=1e-1, rtol=1e-1), "large bf16 mismatch vs reference"

    # --- tiny-contraction shapes (K*e_char < 64) take the XLA fallback path ---
    xs = jax.random.normal(kx, (2, 4, 16), dtype=jnp.float32)
    ws = jax.random.normal(kw, (32, 4, 5), dtype=jnp.float32) * 0.1
    bs = jax.random.normal(kb, (32,), dtype=jnp.float32) * 0.1
    out_s = jax.block_until_ready(cnn_forward(xs, ws, bs, 5))
    assert jnp.allclose(out_s, cnn_reference(xs, ws, bs, 5), atol=1e-4, rtol=1e-4)

    print("KERNEL_OK")
</pallas_src>

<mosaic_0001>
module attributes {stable_mosaic.version = 11 : i64} {
  func.func @_cnn_kernel(%arg0: i32, %arg1: memref<14x8x256xbf16, #tpu.memory_space<vmem>>, %arg2: memref<256x128xbf16, #tpu.memory_space<vmem>>, %arg3: memref<1x128xf32, #tpu.memory_space<vmem>>, %arg4: memref<8x128xf32, #tpu.memory_space<vmem>>) attributes {dimension_semantics = [#tpu.dimension_semantics<parallel>], iteration_bounds = array<i64: 1>, scalar_prefetch = 0 : i64, scratch_operands = 0 : i64, tpu.core_type = #tpu.core_type<tc>, window_params = [{transform_indices = @transform_0, window_bounds = array<i64: 14, 8, 256>}, {pipeline_mode = #tpu.pipeline_mode<synchronous>, transform_indices = @transform_1, window_bounds = array<i64: 256, 128>}, {pipeline_mode = #tpu.pipeline_mode<synchronous>, transform_indices = @transform_2, window_bounds = array<i64: 1, 128>}, {transform_indices = @transform_3, window_bounds = array<i64: 8, 128>}]} {
    %c0 = arith.constant 0 : index
    %c0_0 = arith.constant 0 : index
    %0 = vector.load %arg2[%c0, %c0_0] : memref<256x128xbf16, #tpu.memory_space<vmem>>, vector<256x128xbf16>
    %c0_1 = arith.constant 0 : index
    %c0_2 = arith.constant 0 : index
    %c0_3 = arith.constant 0 : index
    %1 = vector.load %arg1[%c0_1, %c0_2, %c0_3] : memref<14x8x256xbf16, #tpu.memory_space<vmem>>, vector<1x8x256xbf16>
    %2 = vector.shape_cast %1 : vector<1x8x256xbf16> to vector<8x256xbf16>
    %cst = arith.constant dense<0.000000e+00> : vector<8x128xf32>
    %3 = tpu.matmul %2, %0, %cst {dimension_numbers = #tpu.dot_dimension_numbers<[1], [0], [0], [1], [0, 0, 1, 1], [], []>} : vector<8x256xbf16>, vector<256x128xbf16>, vector<8x128xf32> -> vector<8x128xf32>
    %c1 = arith.constant 1 : index
    %c0_4 = arith.constant 0 : index
    %c0_5 = arith.constant 0 : index
    %4 = vector.load %arg1[%c1, %c0_4, %c0_5] : memref<14x8x256xbf16, #tpu.memory_space<vmem>>, vector<1x8x256xbf16>
    %5 = vector.shape_cast %4 : vector<1x8x256xbf16> to vector<8x256xbf16>
    %cst_6 = arith.constant dense<0.000000e+00> : vector<8x128xf32>
    %6 = tpu.matmul %5, %0, %cst_6 {dimension_numbers = #tpu.dot_dimension_numbers<[1], [0], [0], [1], [0, 0, 1, 1], [], []>} : vector<8x256xbf16>, vector<256x128xbf16>, vector<8x128xf32> -> vector<8x128xf32>
    %7 = arith.maximumf %3, %6 : vector<8x128xf32>
    %c2 = arith.constant 2 : index
    %c0_7 = arith.constant 0 : index
    %c0_8 = arith.constant 0 : index
    %8 = vector.load %arg1[%c2, %c0_7, %c0_8] : memref<14x8x256xbf16, #tpu.memory_space<vmem>>, vector<1x8x256xbf16>
    %9 = vector.shape_cast %8 : vector<1x8x256xbf16> to vector<8x256xbf16>
    %cst_9 = arith.constant dense<0.000000e+00> : vector<8x128xf32>
    %10 = tpu.matmul %9, %0, %cst_9 {dimension_numbers = #tpu.dot_dimension_numbers<[1], [0], [0], [1], [0, 0, 1, 1], [], []>} : vector<8x256xbf16>, vector<256x128xbf16>, vector<8x128xf32> -> vector<8x128xf32>
    %11 = arith.maximumf %7, %10 : vector<8x128xf32>
    %c3 = arith.constant 3 : index
    %c0_10 = arith.constant 0 : index
    %c0_11 = arith.constant 0 : index
    %12 = vector.load %arg1[%c3, %c0_10, %c0_11] : memref<14x8x256xbf16, #tpu.memory_space<vmem>>, vector<1x8x256xbf16>
    %13 = vector.shape_cast %12 : vector<1x8x256xbf16> to vector<8x256xbf16>
    %cst_12 = arith.constant dense<0.000000e+00> : vector<8x128xf32>
    %14 = tpu.matmul %13, %0, %cst_12 {dimension_numbers = #tpu.dot_dimension_numbers<[1], [0], [0], [1], [0, 0, 1, 1], [], []>} : vector<8x256xbf16>, vector<256x128xbf16>, vector<8x128xf32> -> vector<8x128xf32>
    %15 = arith.maximumf %11, %14 : vector<8x128xf32>
    %c4 = arith.constant 4 : index
    %c0_13 = arith.constant 0 : index
    %c0_14 = arith.constant 0 : index
    %16 = vector.load %arg1[%c4, %c0_13, %c0_14] : memref<14x8x256xbf16, #tpu.memory_space<vmem>>, vector<1x8x256xbf16>
    %17 = vector.shape_cast %16 : vector<1x8x256xbf16> to vector<8x256xbf16>
    %cst_15 = arith.constant dense<0.000000e+00> : vector<8x128xf32>
    %18 = tpu.matmul %17, %0, %cst_15 {dimension_numbers = #tpu.dot_dimension_numbers<[1], [0], [0], [1], [0, 0, 1, 1], [], []>} : vector<8x256xbf16>, vector<256x128xbf16>, vector<8x128xf32> -> vector<8x128xf32>
    %19 = arith.maximumf %15, %18 : vector<8x128xf32>
    %c5 = arith.constant 5 : index
    %c0_16 = arith.constant 0 : index
    %c0_17 = arith.constant 0 : index
    %20 = vector.load %arg1[%c5, %c0_16, %c0_17] : memref<14x8x256xbf16, #tpu.memory_space<vmem>>, vector<1x8x256xbf16>
    %21 = vector.shape_cast %20 : vector<1x8x256xbf16> to vector<8x256xbf16>
    %cst_18 = arith.constant dense<0.000000e+00> : vector<8x128xf32>
    %22 = tpu.matmul %21, %0, %cst_18 {dimension_numbers = #tpu.dot_dimension_numbers<[1], [0], [0], [1], [0, 0, 1, 1], [], []>} : vector<8x256xbf16>, vector<256x128xbf16>, vector<8x128xf32> -> vector<8x128xf32>
    %23 = arith.maximumf %19, %22 : vector<8x128xf32>
    %c6 = arith.constant 6 : index
    %c0_19 = arith.constant 0 : index
    %c0_20 = arith.constant 0 : index
    %24 = vector.load %arg1[%c6, %c0_19, %c0_20] : memref<14x8x256xbf16, #tpu.memory_space<vmem>>, vector<1x8x256xbf16>
    %25 = vector.shape_cast %24 : vector<1x8x256xbf16> to vector<8x256xbf16>
    %cst_21 = arith.constant dense<0.000000e+00> : vector<8x128xf32>
    %26 = tpu.matmul %25, %0, %cst_21 {dimension_numbers = #tpu.dot_dimension_numbers<[1], [0], [0], [1], [0, 0, 1, 1], [], []>} : vector<8x256xbf16>, vector<256x128xbf16>, vector<8x128xf32> -> vector<8x128xf32>
    %27 = arith.maximumf %23, %26 : vector<8x128xf32>
    %c7 = arith.constant 7 : index
    %c0_22 = arith.constant 0 : index
    %c0_23 = arith.constant 0 : index
    %28 = vector.load %arg1[%c7, %c0_22, %c0_23] : memref<14x8x256xbf16, #tpu.memory_space<vmem>>, vector<1x8x256xbf16>
    %29 = vector.shape_cast %28 : vector<1x8x256xbf16> to vector<8x256xbf16>
    %cst_24 = arith.constant dense<0.000000e+00> : vector<8x128xf32>
    %30 = tpu.matmul %29, %0, %cst_24 {dimension_numbers = #tpu.dot_dimension_numbers<[1], [0], [0], [1], [0, 0, 1, 1], [], []>} : vector<8x256xbf16>, vector<256x128xbf16>, vector<8x128xf32> -> vector<8x128xf32>
    %31 = arith.maximumf %27, %30 : vector<8x128xf32>
    %c8 = arith.constant 8 : index
    %c0_25 = arith.constant 0 : index
    %c0_26 = arith.constant 0 : index
    %32 = vector.load %arg1[%c8, %c0_25, %c0_26] : memref<14x8x256xbf16, #tpu.memory_space<vmem>>, vector<1x8x256xbf16>
    %33 = vector.shape_cast %32 : vector<1x8x256xbf16> to vector<8x256xbf16>
    %cst_27 = arith.constant dense<0.000000e+00> : vector<8x128xf32>
    %34 = tpu.matmul %33, %0, %cst_27 {dimension_numbers = #tpu.dot_dimension_numbers<[1], [0], [0], [1], [0, 0, 1, 1], [], []>} : vector<8x256xbf16>, vector<256x128xbf16>, vector<8x128xf32> -> vector<8x128xf32>
    %35 = arith.maximumf %31, %34 : vector<8x128xf32>
    %c9 = arith.constant 9 : index
    %c0_28 = arith.constant 0 : index
    %c0_29 = arith.constant 0 : index
    %36 = vector.load %arg1[%c9, %c0_28, %c0_29] : memref<14x8x256xbf16, #tpu.memory_space<vmem>>, vector<1x8x256xbf16>
    %37 = vector.shape_cast %36 : vector<1x8x256xbf16> to vector<8x256xbf16>
    %cst_30 = arith.constant dense<0.000000e+00> : vector<8x128xf32>
    %38 = tpu.matmul %37, %0, %cst_30 {dimension_numbers = #tpu.dot_dimension_numbers<[1], [0], [0], [1], [0, 0, 1, 1], [], []>} : vector<8x256xbf16>, vector<256x128xbf16>, vector<8x128xf32> -> vector<8x128xf32>
    %39 = arith.maximumf %35, %38 : vector<8x128xf32>
    %c10 = arith.constant 10 : index
    %c0_31 = arith.constant 0 : index
    %c0_32 = arith.constant 0 : index
    %40 = vector.load %arg1[%c10, %c0_31, %c0_32] : memref<14x8x256xbf16, #tpu.memory_space<vmem>>, vector<1x8x256xbf16>
    %41 = vector.shape_cast %40 : vector<1x8x256xbf16> to vector<8x256xbf16>
    %cst_33 = arith.constant dense<0.000000e+00> : vector<8x128xf32>
    %42 = tpu.matmul %41, %0, %cst_33 {dimension_numbers = #tpu.dot_dimension_numbers<[1], [0], [0], [1], [0, 0, 1, 1], [], []>} : vector<8x256xbf16>, vector<256x128xbf16>, vector<8x128xf32> -> vector<8x128xf32>
    %43 = arith.maximumf %39, %42 : vector<8x128xf32>
    %c11 = arith.constant 11 : index
    %c0_34 = arith.constant 0 : index
    %c0_35 = arith.constant 0 : index
    %44 = vector.load %arg1[%c11, %c0_34, %c0_35] : memref<14x8x256xbf16, #tpu.memory_space<vmem>>, vector<1x8x256xbf16>
    %45 = vector.shape_cast %44 : vector<1x8x256xbf16> to vector<8x256xbf16>
    %cst_36 = arith.constant dense<0.000000e+00> : vector<8x128xf32>
    %46 = tpu.matmul %45, %0, %cst_36 {dimension_numbers = #tpu.dot_dimension_numbers<[1], [0], [0], [1], [0, 0, 1, 1], [], []>} : vector<8x256xbf16>, vector<256x128xbf16>, vector<8x128xf32> -> vector<8x128xf32>
    %47 = arith.maximumf %43, %46 : vector<8x128xf32>
    %c12 = arith.constant 12 : index
    %c0_37 = arith.constant 0 : index
    %c0_38 = arith.constant 0 : index
    %48 = vector.load %arg1[%c12, %c0_37, %c0_38] : memref<14x8x256xbf16, #tpu.memory_space<vmem>>, vector<1x8x256xbf16>
    %49 = vector.shape_cast %48 : vector<1x8x256xbf16> to vector<8x256xbf16>
    %cst_39 = arith.constant dense<0.000000e+00> : vector<8x128xf32>
    %50 = tpu.matmul %49, %0, %cst_39 {dimension_numbers = #tpu.dot_dimension_numbers<[1], [0], [0], [1], [0, 0, 1, 1], [], []>} : vector<8x256xbf16>, vector<256x128xbf16>, vector<8x128xf32> -> vector<8x128xf32>
    %51 = arith.maximumf %47, %50 : vector<8x128xf32>
    %c13 = arith.constant 13 : index
    %c0_40 = arith.constant 0 : index
    %c0_41 = arith.constant 0 : index
    %52 = vector.load %arg1[%c13, %c0_40, %c0_41] : memref<14x8x256xbf16, #tpu.memory_space<vmem>>, vector<1x8x256xbf16>
    %53 = vector.shape_cast %52 : vector<1x8x256xbf16> to vector<8x256xbf16>
    %cst_42 = arith.constant dense<0.000000e+00> : vector<8x128xf32>
    %54 = tpu.matmul %53, %0, %cst_42 {dimension_numbers = #tpu.dot_dimension_numbers<[1], [0], [0], [1], [0, 0, 1, 1], [], []>} : vector<8x256xbf16>, vector<256x128xbf16>, vector<8x128xf32> -> vector<8x128xf32>
    %55 = arith.maximumf %51, %54 : vector<8x128xf32>
    %c0_43 = arith.constant 0 : index
    %c0_44 = arith.constant 0 : index
    %56 = vector.load %arg3[%c0_43, %c0_44] : memref<1x128xf32, #tpu.memory_space<vmem>>, vector<1x128xf32>
    %57 = vector.broadcast %56 : vector<1x128xf32> to vector<8x128xf32>
    %58 = arith.addf %55, %57 : vector<8x128xf32>
    %cst_45 = arith.constant 0.000000e+00 : f32
    %59 = vector.broadcast %cst_45 : f32 to vector<8x128xf32>
    %60 = arith.maximumf %58, %59 : vector<8x128xf32>
    %c0_46 = arith.constant 0 : index
    %c0_47 = arith.constant 0 : index
    %61 = vector.load %arg4[%c0_46, %c0_47] : memref<8x128xf32, #tpu.memory_space<vmem>>, vector<8x128xf32>
    tpu.vector_store %arg4[%c0_46, %c0_47], %60 {strides = array<i32>} : memref<8x128xf32, #tpu.memory_space<vmem>>, vector<8x128xf32>,
    return
  }
  func.func @transform_0(%arg0: i32) -> (i32, i32, i32) {
    %c0_i32 = arith.constant 0 : i32
    %c0_i32_0 = arith.constant 0 : i32
    %c0_i32_1 = arith.constant 0 : i32
    return %c0_i32, %arg0, %c0_i32_0 : i32, i32, i32
  }
  func.func @transform_1(%arg0: i32) -> (i32, i32) {
    %c0_i32 = arith.constant 0 : i32
    %c0_i32_0 = arith.constant 0 : i32
    %c0_i32_1 = arith.constant 0 : i32
    return %c0_i32, %c0_i32_0 : i32, i32
  }
  func.func @transform_2(%arg0: i32) -> (i32, i32) {
    %c0_i32 = arith.constant 0 : i32
    %c0_i32_0 = arith.constant 0 : i32
    %c0_i32_1 = arith.constant 0 : i32
    return %c0_i32, %c0_i32_0 : i32, i32
  }
  func.func @transform_3(%arg0: i32) -> (i32, i32) {
    %c0_i32 = arith.constant 0 : i32
    %c0_i32_0 = arith.constant 0 : i32
    return %arg0, %c0_i32 : i32, i32
  }
}

</mosaic_0001>

<llo_original>
// kernel: tpu_custom_call.1
$region0: #{tpu_custom_call.1}
  #allocation0 [shape = 'u32[]', space=smem, size = 0x4, offset = 0x4, fixed_abs, tag = 'smem constant byte address 0x4 - core index']
  #allocation1 [shape = 'u32[72,128]{1,0:T(1,128)}', space=vmem, size = 0x9000, scoped, tag = 'internal scratch']
  %s0 = inlined_call_operand.hbm [shape: bf16[14,8,256], index: 0, kind: input, shape index: {}]
  %s1 = inlined_call_operand.hbm [shape: bf16[256,128], index: 1, kind: input, shape index: {}]
  %s2 = inlined_call_operand.vmem [shape: f32[1,128], index: 2, kind: input, shape index: {}]
  %s3 = inlined_call_operand.hbm [shape: f32[8,128], index: 3, kind: output, shape index: {}]
  %s4 = sld [smem:[#allocation0]]
  $region30: #{tpu_custom_call.1} parent=0
    _
  %s6 = ssub.s32 1, %s4
  %s7 = scalar_select 0, %s6, %s4
  $region1: #{tpu_custom_call.1} parent=0
    #allocation2 [shape = 'u8[57344]{0}', space=vmem, size = 0xe000, scoped, tag = 'input window, operand 0, single buffered']
    #allocation3 [shape = 's32[1]{0}', space=sflag, size = 0x4, scoped, tag = 'scoped memory for tpu_custom_call.1']
    #allocation4 [shape = 's32[1]{0}', space=sflag, size = 0x4, scoped, tag = 'scoped memory for tpu_custom_call.1']
    #allocation5 [shape = 'u8[65536]{0}', space=vmem, size = 0x10000, scoped, tag = 'input window, operand 1, single buffered']
    #allocation6 [shape = 's32[1]{0}', space=sflag, size = 0x4, scoped, tag = 'scoped memory for tpu_custom_call.1']
    #allocation7 [shape = 'u8[4096]{0}', space=vmem, size = 0x1000, scoped, tag = 'output window, operand 0, single buffered']
    %8 = vsyncpa [#allocation3], 0
    %9 = vsyncpa [#allocation6], 0
    %10 = vsyncpa [#allocation4], 0
    // Predicated region
    $region2: #{tpu_custom_call.1} parent=1 // pred_check
      _
    $region3: #{tpu_custom_call.1} parent=1 // pred_check_branch
      %12 = sbr.rel (0) target = $region5
    $region4: #{tpu_custom_call.1} parent=1 // pred_region
      %14 = vsyncadd [#allocation3], 0
      %s15 = sshll.u32 %s0, 4
      %s16 = int_to_ptr.hbm [resolvable:$true] %s15
      %s17 = sshll.u32 [#allocation2], 4
      %s18 = int_to_ptr.vmem [resolvable:$true] %s17
      %23 = dma.hbm_to_vmem [thread:$0]  %s16, 1792, %s18, [#allocation3], 128, 128, 8
    $region5: #{tpu_custom_call.1} parent=1 // pred_fallthru
      _
    // Predicated region
    $region6: #{tpu_custom_call.1} parent=1 // pred_check
      _
    $region7: #{tpu_custom_call.1} parent=1 // pred_check_branch
      %25 = sbr.rel (0) target = $region9
    $region8: #{tpu_custom_call.1} parent=1 // pred_region
      %27 = vsyncadd [#allocation6], 0
      %s28 = sshll.u32 %s1, 4
      %s29 = int_to_ptr.hbm [resolvable:$true] %s28
      %s30 = sshll.u32 [#allocation5], 4
      %s31 = int_to_ptr.vmem [resolvable:$true] %s30
      %36 = dma.hbm_to_vmem [thread:$0]  %s29, 2048, %s31, [#allocation6], 64, 64, 4
    $region9: #{tpu_custom_call.1} parent=1 // pred_fallthru
      _
    // Predicated region
    $region10: #{tpu_custom_call.1} parent=1 // pred_check
      _
    $region11: #{tpu_custom_call.1} parent=1 // pred_check_branch
      %38 = sbr.rel (0) target = $region13
    $region12: #{tpu_custom_call.1} parent=1 // pred_region
      _
    $region13: #{tpu_custom_call.1} parent=1 // pred_fallthru
      _
    // Predicated region
    $region14: #{tpu_custom_call.1} parent=1 // pred_check
      _
    $region15: #{tpu_custom_call.1} parent=1 // pred_check_branch
      %40 = sbr.rel (0) target = $region17
    $region16: #{tpu_custom_call.1} parent=1 // pred_region
      %42 = dma.done [#allocation3], 1792
    $region17: #{tpu_custom_call.1} parent=1 // pred_fallthru
      _
    // Predicated region
    $region18: #{tpu_custom_call.1} parent=1 // pred_check
      _
    $region19: #{tpu_custom_call.1} parent=1 // pred_check_branch
      %44 = sbr.rel (0) target = $region21
    $region20: #{tpu_custom_call.1} parent=1 // pred_region
      %46 = dma.done [#allocation6], 2048
    $region21: #{tpu_custom_call.1} parent=1 // pred_fallthru
      _
    %v47 = vld [vmem:[#allocation5] sm:$0xf]
    %v48 = vld [vmem:[#allocation5 + $0x4] sm:$0xf]
    %v49 = vld [vmem:[#allocation5 + $0x8] sm:$0xf]
    %v50 = vld [vmem:[#allocation5 + $0xc] sm:$0xf]
    %v51 = vld [vmem:[#allocation5 + $0x10] sm:$0xf]
    %v52 = vld [vmem:[#allocation5 + $0x14] sm:$0xf]
    %v53 = vld [vmem:[#allocation5 + $0x18] sm:$0xf]
    %v54 = vld [vmem:[#allocation5 + $0x1c] sm:$0xf]
    %v55 = vld [vmem:[#allocation5 + $0x20] sm:$0xf]
    %v56 = vld [vmem:[#allocation5 + $0x24] sm:$0xf]
    %v57 = vld [vmem:[#allocation5 + $0x28] sm:$0xf]
    %v58 = vld [vmem:[#allocation5 + $0x2c] sm:$0xf]
    %v59 = vld [vmem:[#allocation5 + $0x30] sm:$0xf]
    %v60 = vld [vmem:[#allocation5 + $0x34] sm:$0xf]
    %v61 = vld [vmem:[#allocation5 + $0x38] sm:$0xf]
    %v62 = vld [vmem:[#allocation5 + $0x3c] sm:$0xf]
    %v63 = vld [vmem:[#allocation5 + $0x40] sm:$0xf]
    %v64 = vld [vmem:[#allocation5 + $0x44] sm:$0xf]
    %v65 = vld [vmem:[#allocation5 + $0x48] sm:$0xf]
    %v66 = vld [vmem:[#allocation5 + $0x4c] sm:$0xf]
    %v67 = vld [vmem:[#allocation5 + $0x50] sm:$0xf]
    %v68 = vld [vmem:[#allocation5 + $0x54] sm:$0xf]
    %v69 = vld [vmem:[#allocation5 + $0x58] sm:$0xf]
    %v70 = vld [vmem:[#allocation5 + $0x5c] sm:$0xf]
    %v71 = vld [vmem:[#allocation5 + $0x60] sm:$0xf]
    %v72 = vld [vmem:[#allocation5 + $0x64] sm:$0xf]
    %v73 = vld [vmem:[#allocation5 + $0x68] sm:$0xf]
    %v74 = vld [vmem:[#allocation5 + $0x6c] sm:$0xf]
    %v75 = vld [vmem:[#allocation5 + $0x70] sm:$0xf]
    %v76 = vld [vmem:[#allocation5 + $0x74] sm:$0xf]
    %v77 = vld [vmem:[#allocation5 + $0x78] sm:$0xf]
    %v78 = vld [vmem:[#allocation5 + $0x7c] sm:$0xf]
    %v79 = vld [vmem:[#allocation2] sm:$0xff]
    %v81 = vunpack.c.l.b16 %v79
    %v82 = vunpack.c.h.b16 %v79
    %v83 = vpack.c.b16 %v81, %v81
    %v84 = vpack.c.b16 %v82, %v82
    %v119 = vunpack.c.l.b16 %v47
    %v120 = vunpack.c.l.b16 %v48
    %v121 = vunpack.c.l.b16 %v49
    %v122 = vunpack.c.l.b16 %v50
    %v123 = vunpack.c.l.b16 %v51
    %v124 = vunpack.c.l.b16 %v52
    %v125 = vunpack.c.l.b16 %v53
    %v126 = vunpack.c.l.b16 %v54
    %v127 = vunpack.c.l.b16 %v55
    %v128 = vunpack.c.l.b16 %v56
    %v129 = vunpack.c.l.b16 %v57
    %v130 = vunpack.c.l.b16 %v58
    %v131 = vunpack.c.l.b16 %v59
    %v132 = vunpack.c.l.b16 %v60
    %v133 = vunpack.c.l.b16 %v61
    %v134 = vunpack.c.l.b16 %v62
    %v135 = vunpack.c.l.b16 %v63
    %v136 = vunpack.c.l.b16 %v64
    %v137 = vunpack.c.l.b16 %v65
    %v138 = vunpack.c.l.b16 %v66
    %v139 = vunpack.c.l.b16 %v67
    %v140 = vunpack.c.l.b16 %v68
    %v141 = vunpack.c.l.b16 %v69
    %v142 = vunpack.c.l.b16 %v70
    %v143 = vunpack.c.l.b16 %v71
    %v144 = vunpack.c.l.b16 %v72
    %v145 = vunpack.c.l.b16 %v73
    %v146 = vunpack.c.l.b16 %v74
    %v147 = vunpack.c.l.b16 %v75
    %v148 = vunpack.c.l.b16 %v76
    %v149 = vunpack.c.l.b16 %v77
    %v150 = vunpack.c.l.b16 %v78
    %v151 = vpack.c.b16 %v120, %v119
    %v152 = vpack.c.b16 %v122, %v121
    %v153 = vpack.c.b16 %v124, %v123
    %v154 = vpack.c.b16 %v126, %v125
    %v155 = vpack.c.b16 %v128, %v127
    %v156 = vpack.c.b16 %v130, %v129
    %v157 = vpack.c.b16 %v132, %v131
    %v158 = vpack.c.b16 %v134, %v133
    %v159 = vpack.c.b16 %v136, %v135
    %v160 = vpack.c.b16 %v138, %v137
    %v161 = vpack.c.b16 %v140, %v139
    %v162 = vpack.c.b16 %v142, %v141
    %v163 = vpack.c.b16 %v144, %v143
    %v164 = vpack.c.b16 %v146, %v145
    %v165 = vpack.c.b16 %v148, %v147
    %v166 = vpack.c.b16 %v150, %v149
    %183 = vmatpush.bf16.msra.mxu0 %v158
    %184 = vmatpush.bf16.msra.mxu0 %v157
    %185 = vmatpush.bf16.msra.mxu0 %v156
    %186 = vmatpush.bf16.msra.mxu0 %v155
    %187 = vmatpush.bf16.msra.mxu0 %v154
    %188 = vmatpush.bf16.msra.mxu0 %v153
    %189 = vmatpush.bf16.msra.mxu0 %v152
    %190 = vmatpush.bf16.msra.mxu0 %v151
    %191 = vmatmul.bf16.gmra.mxu0 %v83
    %v192 = vpop.f32.mrf.mxu0
    %v193 = vadd.f32 0.0, %v192
    %v194 = vpop.f32.mrf.mxu0
    %195 = vdwg.mxu0
    %196 = vmatpush.bf16.msra.mxu0 %v166
    %197 = vmatpush.bf16.msra.mxu0 %v165
    %198 = vmatpush.bf16.msra.mxu0 %v164
    %199 = vmatpush.bf16.msra.mxu0 %v163
    %200 = vmatpush.bf16.msra.mxu0 %v162
    %201 = vmatpush.bf16.msra.mxu0 %v161
    %202 = vmatpush.bf16.msra.mxu0 %v160
    %203 = vmatpush.bf16.msra.mxu0 %v159
    %204 = vmatmul.bf16.gmra.mxu0 %v84
    %v205 = vpop.f32.mrf.mxu0
    %v206 = vadd.f32 %v193, %v205
    %v207 = vpop.f32.mrf.mxu0
    %208 = vdwg.mxu0
    %s209 = scalar_lea.vmem [#allocation2], 8
    %v210 = vld [vmem:[%s209] sm:$0xff]
    %v212 = vunpack.c.l.b16 %v210
    %v213 = vunpack.c.h.b16 %v210
    %v214 = vpack.c.b16 %v212, %v212
    %v215 = vpack.c.b16 %v213, %v213
    %218 = vmatpush.bf16.msra.mxu0 %v158
    %219 = vmatpush.bf16.msra.mxu0 %v157
    %220 = vmatpush.bf16.msra.mxu0 %v156
    %221 = vmatpush.bf16.msra.mxu0 %v155
    %222 = vmatpush.bf16.msra.mxu0 %v154
    %223 = vmatpush.bf16.msra.mxu0 %v153
    %224 = vmatpush.bf16.msra.mxu0 %v152
    %225 = vmatpush.bf16.msra.mxu0 %v151
    %226 = vmatmul.bf16.gmra.mxu0 %v214
    %v227 = vpop.f32.mrf.mxu0
    %v228 = vadd.f32 0.0, %v227
    %v229 = vpop.f32.mrf.mxu0
    %230 = vdwg.mxu0
    %231 = vmatpush.bf16.msra.mxu0 %v166
    %232 = vmatpush.bf16.msra.mxu0 %v165
    %233 = vmatpush.bf16.msra.mxu0 %v164
    %234 = vmatpush.bf16.msra.mxu0 %v163
    %235 = vmatpush.bf16.msra.mxu0 %v162
    %236 = vmatpush.bf16.msra.mxu0 %v161
    %237 = vmatpush.bf16.msra.mxu0 %v160
    %238 = vmatpush.bf16.msra.mxu0 %v159
    %239 = vmatmul.bf16.gmra.mxu0 %v215
    %v240 = vpop.f32.mrf.mxu0
    %v241 = vadd.f32 %v228, %v240
    %v242 = vpop.f32.mrf.mxu0
    %243 = vdwg.mxu0
    %v244 = vmax.f32 %v206, %v241
    %s245 = scalar_lea.vmem [#allocation2], 16
    %v246 = vld [vmem:[%s245] sm:$0xff]
    %v248 = vunpack.c.l.b16 %v246
    %v249 = vunpack.c.h.b16 %v246
    %v250 = vpack.c.b16 %v248, %v248
    %v251 = vpack.c.b16 %v249, %v249
    %254 = vmatpush.bf16.msra.mxu0 %v158
    %255 = vmatpush.bf16.msra.mxu0 %v157
    %256 = vmatpush.bf16.msra.mxu0 %v156
    %257 = vmatpush.bf16.msra.mxu0 %v155
    %258 = vmatpush.bf16.msra.mxu0 %v154
    %259 = vmatpush.bf16.msra.mxu0 %v153
    %260 = vmatpush.bf16.msra.mxu0 %v152
    %261 = vmatpush.bf16.msra.mxu0 %v151
    %262 = vmatmul.bf16.gmra.mxu0 %v250
    %v263 = vpop.f32.mrf.mxu0
    %v264 = vadd.f32 0.0, %v263
    %v265 = vpop.f32.mrf.mxu0
    %266 = vdwg.mxu0
    %267 = vmatpush.bf16.msra.mxu0 %v166
    %268 = vmatpush.bf16.msra.mxu0 %v165
    %269 = vmatpush.bf16.msra.mxu0 %v164
    %270 = vmatpush.bf16.msra.mxu0 %v163
    %271 = vmatpush.bf16.msra.mxu0 %v162
    %272 = vmatpush.bf16.msra.mxu0 %v161
    %273 = vmatpush.bf16.msra.mxu0 %v160
    %274 = vmatpush.bf16.msra.mxu0 %v159
    %275 = vmatmul.bf16.gmra.mxu0 %v251
    %v276 = vpop.f32.mrf.mxu0
    %v277 = vadd.f32 %v264, %v276
    %v278 = vpop.f32.mrf.mxu0
    %279 = vdwg.mxu0
    %v280 = vmax.f32 %v244, %v277
    %s281 = scalar_lea.vmem [#allocation2], 24
    %v282 = vld [vmem:[%s281] sm:$0xff]
    %v284 = vunpack.c.l.b16 %v282
    %v285 = vunpack.c.h.b16 %v282
    %v286 = vpack.c.b16 %v284, %v284
    %v287 = vpack.c.b16 %v285, %v285
    %290 = vmatpush.bf16.msra.mxu0 %v158
    %291 = vmatpush.bf16.msra.mxu0 %v157
    %292 = vmatpush.bf16.msra.mxu0 %v156
    %293 = vmatpush.bf16.msra.mxu0 %v155
    %294 = vmatpush.bf16.msra.mxu0 %v154
    %295 = vmatpush.bf16.msra.mxu0 %v153
    %296 = vmatpush.bf16.msra.mxu0 %v152
    %297 = vmatpush.bf16.msra.mxu0 %v151
    %298 = vmatmul.bf16.gmra.mxu0 %v286
    %v299 = vpop.f32.mrf.mxu0
    %v300 = vadd.f32 0.0, %v299
    %v301 = vpop.f32.mrf.mxu0
    %302 = vdwg.mxu0
    %303 = vmatpush.bf16.msra.mxu0 %v166
    %304 = vmatpush.bf16.msra.mxu0 %v165
    %305 = vmatpush.bf16.msra.mxu0 %v164
    %306 = vmatpush.bf16.msra.mxu0 %v163
    %307 = vmatpush.bf16.msra.mxu0 %v162
    %308 = vmatpush.bf16.msra.mxu0 %v161
    %309 = vmatpush.bf16.msra.mxu0 %v160
    %310 = vmatpush.bf16.msra.mxu0 %v159
    %311 = vmatmul.bf16.gmra.mxu0 %v287
    %v312 = vpop.f32.mrf.mxu0
    %v313 = vadd.f32 %v300, %v312
    %v314 = vpop.f32.mrf.mxu0
    %315 = vdwg.mxu0
    %v316 = vmax.f32 %v280, %v313
    %s317 = scalar_lea.vmem [#allocation2], 32
    %v318 = vld [vmem:[%s317] sm:$0xff]
    %v320 = vunpack.c.l.b16 %v318
    %v321 = vunpack.c.h.b16 %v318
    %v322 = vpack.c.b16 %v320, %v320
    %v323 = vpack.c.b16 %v321, %v321
    %326 = vmatpush.bf16.msra.mxu0 %v158
    %327 = vmatpush.bf16.msra.mxu0 %v157
    %328 = vmatpush.bf16.msra.mxu0 %v156
    %329 = vmatpush.bf16.msra.mxu0 %v155
    %330 = vmatpush.bf16.msra.mxu0 %v154
    %331 = vmatpush.bf16.msra.mxu0 %v153
    %332 = vmatpush.bf16.msra.mxu0 %v152
    %333 = vmatpush.bf16.msra.mxu0 %v151
    %334 = vmatmul.bf16.gmra.mxu0 %v322
    %v335 = vpop.f32.mrf.mxu0
    %v336 = vadd.f32 0.0, %v335
    %v337 = vpop.f32.mrf.mxu0
    %338 = vdwg.mxu0
    %339 = vmatpush.bf16.msra.mxu0 %v166
    %340 = vmatpush.bf16.msra.mxu0 %v165
    %341 = vmatpush.bf16.msra.mxu0 %v164
    %342 = vmatpush.bf16.msra.mxu0 %v163
    %343 = vmatpush.bf16.msra.mxu0 %v162
    %344 = vmatpush.bf16.msra.mxu0 %v161
    %345 = vmatpush.bf16.msra.mxu0 %v160
    %346 = vmatpush.bf16.msra.mxu0 %v159
    %347 = vmatmul.bf16.gmra.mxu0 %v323
    %v348 = vpop.f32.mrf.mxu0
    %v349 = vadd.f32 %v336, %v348
    %v350 = vpop.f32.mrf.mxu0
    %351 = vdwg.mxu0
    %v352 = vmax.f32 %v316, %v349
    %s353 = scalar_lea.vmem [#allocation2], 40
    %v354 = vld [vmem:[%s353] sm:$0xff]
    %v356 = vunpack.c.l.b16 %v354
    %v357 = vunpack.c.h.b16 %v354
    %v358 = vpack.c.b16 %v356, %v356
    %v359 = vpack.c.b16 %v357, %v357
    %362 = vmatpush.bf16.msra.mxu0 %v158
    %363 = vmatpush.bf16.msra.mxu0 %v157
    %364 = vmatpush.bf16.msra.mxu0 %v156
    %365 = vmatpush.bf16.msra.mxu0 %v155
    %366 = vmatpush.bf16.msra.mxu0 %v154
    %367 = vmatpush.bf16.msra.mxu0 %v153
    %368 = vmatpush.bf16.msra.mxu0 %v152
    %369 = vmatpush.bf16.msra.mxu0 %v151
    %370 = vmatmul.bf16.gmra.mxu0 %v358
    %v371 = vpop.f32.mrf.mxu0
    %v372 = vadd.f32 0.0, %v371
    %v373 = vpop.f32.mrf.mxu0
    %374 = vdwg.mxu0
    %375 = vmatpush.bf16.msra.mxu0 %v166
    %376 = vmatpush.bf16.msra.mxu0 %v165
    %377 = vmatpush.bf16.msra.mxu0 %v164
    %378 = vmatpush.bf16.msra.mxu0 %v163
    %379 = vmatpush.bf16.msra.mxu0 %v162
    %380 = vmatpush.bf16.msra.mxu0 %v161
    %381 = vmatpush.bf16.msra.mxu0 %v160
    %382 = vmatpush.bf16.msra.mxu0 %v159
    %383 = vmatmul.bf16.gmra.mxu0 %v359
    %v384 = vpop.f32.mrf.mxu0
    %v385 = vadd.f32 %v372, %v384
    %v386 = vpop.f32.mrf.mxu0
    %387 = vdwg.mxu0
    %v388 = vmax.f32 %v352, %v385
    %s389 = scalar_lea.vmem [#allocation2], 48
    %v390 = vld [vmem:[%s389] sm:$0xff]
    %v392 = vunpack.c.l.b16 %v390
    %v393 = vunpack.c.h.b16 %v390
    %v394 = vpack.c.b16 %v392, %v392
    %v395 = vpack.c.b16 %v393, %v393
    %398 = vmatpush.bf16.msra.mxu0 %v158
    %399 = vmatpush.bf16.msra.mxu0 %v157
    %400 = vmatpush.bf16.msra.mxu0 %v156
    %401 = vmatpush.bf16.msra.mxu0 %v155
    %402 = vmatpush.bf16.msra.mxu0 %v154
    %403 = vmatpush.bf16.msra.mxu0 %v153
    %404 = vmatpush.bf16.msra.mxu0 %v152
    %405 = vmatpush.bf16.msra.mxu0 %v151
    %406 = vmatmul.bf16.gmra.mxu0 %v394
    %v407 = vpop.f32.mrf.mxu0
    %v408 = vadd.f32 0.0, %v407
    %v409 = vpop.f32.mrf.mxu0
    %410 = vdwg.mxu0
    %411 = vmatpush.bf16.msra.mxu0 %v166
    %412 = vmatpush.bf16.msra.mxu0 %v165
    %413 = vmatpush.bf16.msra.mxu0 %v164
    %414 = vmatpush.bf16.msra.mxu0 %v163
    %415 = vmatpush.bf16.msra.mxu0 %v162
    %416 = vmatpush.bf16.msra.mxu0 %v161
    %417 = vmatpush.bf16.msra.mxu0 %v160
    %418 = vmatpush.bf16.msra.mxu0 %v159
    %419 = vmatmul.bf16.gmra.mxu0 %v395
    %v420 = vpop.f32.mrf.mxu0
    %v421 = vadd.f32 %v408, %v420
    %v422 = vpop.f32.mrf.mxu0
    %423 = vdwg.mxu0
    %v424 = vmax.f32 %v388, %v421
    %s425 = scalar_lea.vmem [#allocation2], 56
    %v426 = vld [vmem:[%s425] sm:$0xff]
    %v428 = vunpack.c.l.b16 %v426
    %v429 = vunpack.c.h.b16 %v426
    %v430 = vpack.c.b16 %v428, %v428
    %v431 = vpack.c.b16 %v429, %v429
    %434 = vmatpush.bf16.msra.mxu0 %v158
    %435 = vmatpush.bf16.msra.mxu0 %v157
    %436 = vmatpush.bf16.msra.mxu0 %v156
    %437 = vmatpush.bf16.msra.mxu0 %v155
    %438 = vmatpush.bf16.msra.mxu0 %v154
    %439 = vmatpush.bf16.msra.mxu0 %v153
    %440 = vmatpush.bf16.msra.mxu0 %v152
    %441 = vmatpush.bf16.msra.mxu0 %v151
    %442 = vmatmul.bf16.gmra.mxu0 %v430
    %v443 = vpop.f32.mrf.mxu0
    %v444 = vadd.f32 0.0, %v443
    %v445 = vpop.f32.mrf.mxu0
    %446 = vdwg.mxu0
    %447 = vmatpush.bf16.msra.mxu0 %v166
    %448 = vmatpush.bf16.msra.mxu0 %v165
    %449 = vmatpush.bf16.msra.mxu0 %v164
    %450 = vmatpush.bf16.msra.mxu0 %v163
    %451 = vmatpush.bf16.msra.mxu0 %v162
    %452 = vmatpush.bf16.msra.mxu0 %v161
    %453 = vmatpush.bf16.msra.mxu0 %v160
    %454 = vmatpush.bf16.msra.mxu0 %v159
    %455 = vmatmul.bf16.gmra.mxu0 %v431
    %v456 = vpop.f32.mrf.mxu0
    %v457 = vadd.f32 %v444, %v456
    %v458 = vpop.f32.mrf.mxu0
    %459 = vdwg.mxu0
    %v460 = vmax.f32 %v424, %v457
    %s461 = scalar_lea.vmem [#allocation2], 64
    %v462 = vld [vmem:[%s461] sm:$0xff]
    %v464 = vunpack.c.l.b16 %v462
    %v465 = vunpack.c.h.b16 %v462
    %v466 = vpack.c.b16 %v464, %v464
    %v467 = vpack.c.b16 %v465, %v465
    %470 = vmatpush.bf16.msra.mxu0 %v158
    %471 = vmatpush.bf16.msra.mxu0 %v157
    %472 = vmatpush.bf16.msra.mxu0 %v156
    %473 = vmatpush.bf16.msra.mxu0 %v155
    %474 = vmatpush.bf16.msra.mxu0 %v154
    %475 = vmatpush.bf16.msra.mxu0 %v153
    %476 = vmatpush.bf16.msra.mxu0 %v152
    %477 = vmatpush.bf16.msra.mxu0 %v151
    %478 = vmatmul.bf16.gmra.mxu0 %v466
    %v479 = vpop.f32.mrf.mxu0
    %v480 = vadd.f32 0.0, %v479
    %v481 = vpop.f32.mrf.mxu0
    %482 = vdwg.mxu0
    %483 = vmatpush.bf16.msra.mxu0 %v166
    %484 = vmatpush.bf16.msra.mxu0 %v165
    %485 = vmatpush.bf16.msra.mxu0 %v164
    %486 = vmatpush.bf16.msra.mxu0 %v163
    %487 = vmatpush.bf16.msra.mxu0 %v162
    %488 = vmatpush.bf16.msra.mxu0 %v161
    %489 = vmatpush.bf16.msra.mxu0 %v160
    %490 = vmatpush.bf16.msra.mxu0 %v159
    %491 = vmatmul.bf16.gmra.mxu0 %v467
    %v492 = vpop.f32.mrf.mxu0
    %v493 = vadd.f32 %v480, %v492
    %v494 = vpop.f32.mrf.mxu0
    %495 = vdwg.mxu0
    %v496 = vmax.f32 %v460, %v493
    %s497 = scalar_lea.vmem [#allocation2], 72
    %v498 = vld [vmem:[%s497] sm:$0xff]
    %v500 = vunpack.c.l.b16 %v498
    %v501 = vunpack.c.h.b16 %v498
    %v502 = vpack.c.b16 %v500, %v500
    %v503 = vpack.c.b16 %v501, %v501
    %506 = vmatpush.bf16.msra.mxu0 %v158
    %507 = vmatpush.bf16.msra.mxu0 %v157
    %508 = vmatpush.bf16.msra.mxu0 %v156
    %509 = vmatpush.bf16.msra.mxu0 %v155
    %510 = vmatpush.bf16.msra.mxu0 %v154
    %511 = vmatpush.bf16.msra.mxu0 %v153
    %512 = vmatpush.bf16.msra.mxu0 %v152
    %513 = vmatpush.bf16.msra.mxu0 %v151
    %514 = vmatmul.bf16.gmra.mxu0 %v502
    %v515 = vpop.f32.mrf.mxu0
    %v516 = vadd.f32 0.0, %v515
    %v517 = vpop.f32.mrf.mxu0
    %518 = vdwg.mxu0
    %519 = vmatpush.bf16.msra.mxu0 %v166
    %520 = vmatpush.bf16.msra.mxu0 %v165
    %521 = vmatpush.bf16.msra.mxu0 %v164
    %522 = vmatpush.bf16.msra.mxu0 %v163
    %523 = vmatpush.bf16.msra.mxu0 %v162
    %524 = vmatpush.bf16.msra.mxu0 %v161
    %525 = vmatpush.bf16.msra.mxu0 %v160
    %526 = vmatpush.bf16.msra.mxu0 %v159
    %527 = vmatmul.bf16.gmra.mxu0 %v503
    %v528 = vpop.f32.mrf.mxu0
    %v529 = vadd.f32 %v516, %v528
    %v530 = vpop.f32.mrf.mxu0
    %531 = vdwg.mxu0
    %v532 = vmax.f32 %v496, %v529
    %s533 = scalar_lea.vmem [#allocation2], 80
    %v534 = vld [vmem:[%s533] sm:$0xff]
    %v536 = vunpack.c.l.b16 %v534
    %v537 = vunpack.c.h.b16 %v534
    %v538 = vpack.c.b16 %v536, %v536
    %v539 = vpack.c.b16 %v537, %v537
    %542 = vmatpush.bf16.msra.mxu0 %v158
    %543 = vmatpush.bf16.msra.mxu0 %v157
    %544 = vmatpush.bf16.msra.mxu0 %v156
    %545 = vmatpush.bf16.msra.mxu0 %v155
    %546 = vmatpush.bf16.msra.mxu0 %v154
    %547 = vmatpush.bf16.msra.mxu0 %v153
    %548 = vmatpush.bf16.msra.mxu0 %v152
    %549 = vmatpush.bf16.msra.mxu0 %v151
    %550 = vmatmul.bf16.gmra.mxu0 %v538
    %v551 = vpop.f32.mrf.mxu0
    %v552 = vadd.f32 0.0, %v551
    %v553 = vpop.f32.mrf.mxu0
    %554 = vdwg.mxu0
    %555 = vmatpush.bf16.msra.mxu0 %v166
    %556 = vmatpush.bf16.msra.mxu0 %v165
    %557 = vmatpush.bf16.msra.mxu0 %v164
    %558 = vmatpush.bf16.msra.mxu0 %v163
    %559 = vmatpush.bf16.msra.mxu0 %v162
    %560 = vmatpush.bf16.msra.mxu0 %v161
    %561 = vmatpush.bf16.msra.mxu0 %v160
    %562 = vmatpush.bf16.msra.mxu0 %v159
    %563 = vmatmul.bf16.gmra.mxu0 %v539
    %v564 = vpop.f32.mrf.mxu0
    %v565 = vadd.f32 %v552, %v564
    %v566 = vpop.f32.mrf.mxu0
    %567 = vdwg.mxu0
    %v568 = vmax.f32 %v532, %v565
    %s569 = scalar_lea.vmem [#allocation2], 88
    %v570 = vld [vmem:[%s569] sm:$0xff]
    %v572 = vunpack.c.l.b16 %v570
    %v573 = vunpack.c.h.b16 %v570
    %v574 = vpack.c.b16 %v572, %v572
    %v575 = vpack.c.b16 %v573, %v573
    %578 = vmatpush.bf16.msra.mxu0 %v158
    %579 = vmatpush.bf16.msra.mxu0 %v157
    %580 = vmatpush.bf16.msra.mxu0 %v156
    %581 = vmatpush.bf16.msra.mxu0 %v155
    %582 = vmatpush.bf16.msra.mxu0 %v154
    %583 = vmatpush.bf16.msra.mxu0 %v153
    %584 = vmatpush.bf16.msra.mxu0 %v152
    %585 = vmatpush.bf16.msra.mxu0 %v151
    %586 = vmatmul.bf16.gmra.mxu0 %v574
    %v587 = vpop.f32.mrf.mxu0
    %v588 = vadd.f32 0.0, %v587
    %v589 = vpop.f32.mrf.mxu0
    %590 = vdwg.mxu0
    %591 = vmatpush.bf16.msra.mxu0 %v166
    %592 = vmatpush.bf16.msra.mxu0 %v165
    %593 = vmatpush.bf16.msra.mxu0 %v164
    %594 = vmatpush.bf16.msra.mxu0 %v163
    %595 = vmatpush.bf16.msra.mxu0 %v162
    %596 = vmatpush.bf16.msra.mxu0 %v161
    %597 = vmatpush.bf16.msra.mxu0 %v160
    %598 = vmatpush.bf16.msra.mxu0 %v159
    %599 = vmatmul.bf16.gmra.mxu0 %v575
    %v600 = vpop.f32.mrf.mxu0
    %v601 = vadd.f32 %v588, %v600
    %v602 = vpop.f32.mrf.mxu0
    %603 = vdwg.mxu0
    %v604 = vmax.f32 %v568, %v601
    %s605 = scalar_lea.vmem [#allocation2], 96
    %v606 = vld [vmem:[%s605] sm:$0xff]
    %v608 = vunpack.c.l.b16 %v606
    %v609 = vunpack.c.h.b16 %v606
    %v610 = vpack.c.b16 %v608, %v608
    %v611 = vpack.c.b16 %v609, %v609
    %614 = vmatpush.bf16.msra.mxu0 %v158
    %615 = vmatpush.bf16.msra.mxu0 %v157
    %616 = vmatpush.bf16.msra.mxu0 %v156
    %617 = vmatpush.bf16.msra.mxu0 %v155
    %618 = vmatpush.bf16.msra.mxu0 %v154
    %619 = vmatpush.bf16.msra.mxu0 %v153
    %620 = vmatpush.bf16.msra.mxu0 %v152
    %621 = vmatpush.bf16.msra.mxu0 %v151
    %622 = vmatmul.bf16.gmra.mxu0 %v610
    %v623 = vpop.f32.mrf.mxu0
    %v624 = vadd.f32 0.0, %v623
    %v625 = vpop.f32.mrf.mxu0
    %626 = vdwg.mxu0
    %627 = vmatpush.bf16.msra.mxu0 %v166
    %628 = vmatpush.bf16.msra.mxu0 %v165
    %629 = vmatpush.bf16.msra.mxu0 %v164
    %630 = vmatpush.bf16.msra.mxu0 %v163
    %631 = vmatpush.bf16.msra.mxu0 %v162
    %632 = vmatpush.bf16.msra.mxu0 %v161
    %633 = vmatpush.bf16.msra.mxu0 %v160
    %634 = vmatpush.bf16.msra.mxu0 %v159
    %635 = vmatmul.bf16.gmra.mxu0 %v611
    %v636 = vpop.f32.mrf.mxu0
    %v637 = vadd.f32 %v624, %v636
    %v638 = vpop.f32.mrf.mxu0
    %639 = vdwg.mxu0
    %v640 = vmax.f32 %v604, %v637
    %s641 = scalar_lea.vmem [#allocation2], 104
    %v642 = vld [vmem:[%s641] sm:$0xff]
    %v644 = vunpack.c.l.b16 %v642
    %v645 = vunpack.c.h.b16 %v642
    %v646 = vpack.c.b16 %v644, %v644
    %v647 = vpack.c.b16 %v645, %v645
    %650 = vmatpush.bf16.msra.mxu0 %v158
    %651 = vmatpush.bf16.msra.mxu0 %v157
    %652 = vmatpush.bf16.msra.mxu0 %v156
    %653 = vmatpush.bf16.msra.mxu0 %v155
    %654 = vmatpush.bf16.msra.mxu0 %v154
    %655 = vmatpush.bf16.msra.mxu0 %v153
    %656 = vmatpush.bf16.msra.mxu0 %v152
    %657 = vmatpush.bf16.msra.mxu0 %v151
    %658 = vmatmul.bf16.gmra.mxu0 %v646
    %v659 = vpop.f32.mrf.mxu0
    %v660 = vadd.f32 0.0, %v659
    %v661 = vpop.f32.mrf.mxu0
    %662 = vdwg.mxu0
    %663 = vmatpush.bf16.msra.mxu0 %v166
    %664 = vmatpush.bf16.msra.mxu0 %v165
    %665 = vmatpush.bf16.msra.mxu0 %v164
    %666 = vmatpush.bf16.msra.mxu0 %v163
    %667 = vmatpush.bf16.msra.mxu0 %v162
    %668 = vmatpush.bf16.msra.mxu0 %v161
    %669 = vmatpush.bf16.msra.mxu0 %v160
    %670 = vmatpush.bf16.msra.mxu0 %v159
    %671 = vmatmul.bf16.gmra.mxu0 %v647
    %v672 = vpop.f32.mrf.mxu0
    %v673 = vadd.f32 %v660, %v672
    %v674 = vpop.f32.mrf.mxu0
    %675 = vdwg.mxu0
    %v676 = vmax.f32 %v640, %v673
    %v677 = vld [vmem:[%s2] sm:$0x1]
    %v679 = vperm.slane %v677, 0
    %v681 = vadd.f32 %v676, %v679
    %v682 = vmax.f32 %v681, 0.0
    %683 = vst [vmem:[#allocation7] sm:$0xff] %v682
    // Predicated region
    $region22: #{tpu_custom_call.1} parent=1 // pred_check
      _
    $region23: #{tpu_custom_call.1} parent=1 // pred_check_branch
      %685 = sbr.rel (0) target = $region25
    $region24: #{tpu_custom_call.1} parent=1 // pred_region
      %687 = vsyncadd [#allocation4], 0
      %s689 = sshll.u32 [#allocation7], 4
      %s690 = int_to_ptr.vmem [resolvable:$true] %s689
      %s691 = sshll.u32 %s3, 4
      %s692 = int_to_ptr.hbm [resolvable:$true] %s691
      %694 = dma.vmem_to_hbm [thread:$0]  %s690, 128, %s692, [#allocation4]
    $region25: #{tpu_custom_call.1} parent=1 // pred_fallthru
      _
    // Predicated region
    $region26: #{tpu_custom_call.1} parent=1 // pred_check
      _
    $region27: #{tpu_custom_call.1} parent=1 // pred_check_branch
      %696 = sbr.rel (0) target = $region29
    $region28: #{tpu_custom_call.1} parent=1 // pred_region
      %698 = dma.done [#allocation4], 128
    $region29: #{tpu_custom_call.1} parent=1 // pred_fallthru
      _
    %699 = vsyncpa [#allocation3], 1
    %700 = vsyncpa [#allocation6], 1
    %701 = vsyncpa [#allocation4], 1

</llo_original>
